<compile_context>
chip_gen: v7x
topology: tpu7x:2x2x1
jax: 0.10.0
libtpu: 0.0.40
codegen_flags: <defaults>
</compile_context>

<pallas_src>
import jax
import jax.numpy as jnp
from jax.experimental import pallas as pl
from jax.experimental.pallas import tpu as pltpu

DIM = 256   # self.dim == self.lstm_hidden in GeniePathLayer


# ------------------------------ spec helpers --------------------------------------
def _const_spec(shape):
    """BlockSpec for a grid-invariant operand: single-buffered (no refetch needed)."""
    zeros = (0,) * len(shape)
    try:
        return pl.BlockSpec(shape, lambda i: zeros, pipeline_mode=pl.Buffered(1))
    except TypeError:   # older jax without pipeline_mode kwarg
        return pl.BlockSpec(shape, lambda i: zeros)


def _tpu_tuning():
    """(TM, vmem_limit_bytes) per TPU generation."""
    try:
        vmem_cap = int(pltpu.get_tpu_info().vmem_capacity_bytes)
    except Exception:
        vmem_cap = 64 * 1024 * 1024            # assume smallest (v7x) if query unavailable
    if vmem_cap >= 100 * 1024 * 1024:          # v5e / v6e: 128 MiB VMEM per TC
        return 512, 96 * 1024 * 1024
    return 256, 48 * 1024 * 1024               # v7x: 64 MiB per TC, leave headroom


# ----------------------------- kernel 1: projection -----------------------------
def _proj_kernel(x_ref, wg_ref, xw_ref, scal_ref):
    # x_ref: (TM, IDp) bf16, wg_ref: (IDp, DIM+128) bf16
    xw_ext = jnp.dot(x_ref[...], wg_ref[...], preferred_element_type=jnp.float32)
    xw_ref[...] = xw_ext[:, :DIM].astype(jnp.bfloat16)   # projected features (MXU operand later)
    scal_ref[...] = xw_ext[:, DIM:]                       # col 0 = a_dst, col 1 = a_src, rest 0
    # TODO(synk): for very large in_dim the 128 folded columns add ~33% MXU work in this
    #             kernel; compute a_dst/a_src with a tiny K=DIM matmul against xw instead.


# ------------------------- kernel 2: attention + LSTM ---------------------------
def _attn_lstm_kernel(adj_ref, scal_ref, asrc_ref, xw_ref, bias_ref, h_ref, c_ref,
                      wih_ref, whh_ref, h_out_ref, c_out_ref):
    f32 = jnp.float32

    # ---------------- Breadth: GATConv (heads=1) + tanh, per dst-row tile ----------------
    a_dst = scal_ref[:, 0:1]                          # (TM, 1)  f32
    a_src = asrc_ref[...]                             # (1, Np)  f32
    e = a_dst + a_src                                 # (TM, Np) attention logits
    e = jnp.maximum(e, 0.2 * e)                       # LeakyReLU(0.2)
    e = jnp.where(adj_ref[...] > 0, e, f32(-1e30))    # mask non-edges (self loops included)
    e = e - jnp.max(e, axis=-1, keepdims=True)
    p = jnp.exp(e)                                    # masked entries underflow to exactly 0
    inv = pl.reciprocal(jnp.sum(p, axis=-1, keepdims=True), approx=True)   # (TM, 1)
    # aggregate unnormalized, normalize post-accumulate (per-row scale, mathematically equal)
    agg = jnp.dot(p.astype(jnp.bfloat16), xw_ref[...], preferred_element_type=f32)
    xt = jnp.tanh(agg * inv + bias_ref[...])          # (TM, DIM)

    # ---------------- Depth: single-timestep LSTM cell (bias=False) ----------------------
    h = h_ref[...]                                    # (TM, DIM) bf16
    c = c_ref[...]                                    # (TM, DIM) f32
    gates = (jnp.dot(xt.astype(jnp.bfloat16), wih_ref[...], preferred_element_type=f32)
             + jnp.dot(h, whh_ref[...], preferred_element_type=f32))       # (TM, 4*DIM)
    i_g = jax.nn.sigmoid(gates[:, 0 * DIM:1 * DIM])
    f_g = jax.nn.sigmoid(gates[:, 1 * DIM:2 * DIM])
    g_g = jnp.tanh(gates[:, 2 * DIM:3 * DIM])
    o_g = jax.nn.sigmoid(gates[:, 3 * DIM:4 * DIM])
    c_new = f_g * c + i_g * g_g
    h_new = o_g * jnp.tanh(c_new)

    h_out_ref[...] = h_new     # seq-len-1 LSTM: output == new hidden state
    c_out_ref[...] = c_new


# --------------------------------- parameters ------------------------------------
def init_params(key, in_dim):
    ks = jax.random.split(key, 5)
    s = lambda fan: 1.0 / jnp.sqrt(jnp.float32(fan))
    w_gat = jax.random.normal(ks[0], (DIM, in_dim), jnp.float32) * s(in_dim)   # GATConv.lin.weight
    att_src = jax.random.normal(ks[1], (1, DIM), jnp.float32) * s(DIM)         # GATConv.att_src
    att_dst = jax.random.normal(ks[2], (1, DIM), jnp.float32) * s(DIM)         # GATConv.att_dst
    bias = jnp.zeros((1, DIM), jnp.float32)                                    # GATConv.bias
    w_ih = jax.random.normal(ks[3], (4 * DIM, DIM), jnp.float32) * s(DIM)      # LSTM.weight_ih_l0
    w_hh = jax.random.normal(ks[4], (4 * DIM, DIM), jnp.float32) * s(DIM)      # LSTM.weight_hh_l0

    # --- fold attention vectors into the projection; pad & cast for the kernels ---
    idp = pl.cdiv(in_dim, 128) * 128
    wg_t = w_gat.T                                                   # (in_dim, DIM)
    scal_cols = jnp.zeros((in_dim, 128), jnp.float32)
    scal_cols = scal_cols.at[:, 0:1].set(wg_t @ att_dst.T)           # col 0 -> a_dst
    scal_cols = scal_cols.at[:, 1:2].set(wg_t @ att_src.T)           # col 1 -> a_src
    wg_ext = jnp.concatenate([wg_t, scal_cols], axis=1)              # (in_dim, DIM+128)
    wg_ext = jnp.zeros((idp, DIM + 128), jnp.float32).at[:in_dim].set(wg_ext)

    return dict(in_dim=in_dim,
                wg_ext=wg_ext.astype(jnp.bfloat16),
                bias=bias,
                w_ih_t=w_ih.T.astype(jnp.bfloat16),                  # (DIM, 4*DIM), i|f|g|o
                w_hh_t=w_hh.T.astype(jnp.bfloat16))                  # (DIM, 4*DIM)


# ----------------------------------- wrapper --------------------------------------
def geniepath_layer(x, edge_index, h, c, params, *, tm=None):
    """x: [N, in_dim], edge_index: [2, E] (row0=src, row1=dst), h,c: [1, N, DIM]."""
    tm_auto, vmem_limit = _tpu_tuning()
    if tm is None:
        tm = tm_auto

    N, in_dim = x.shape
    np_ = tm * pl.cdiv(N, tm)                 # nodes padded to a multiple of the row tile
    idp = pl.cdiv(in_dim, 128) * 128          # lane-dense input features

    # pad node features / LSTM state with zeros (padded rows are sliced off at the end)
    x_p = jnp.zeros((np_, idp), jnp.bfloat16).at[:N, :in_dim].set(x.astype(jnp.bfloat16))
    h_p = jnp.zeros((np_, DIM), jnp.bfloat16).at[:N].set(h[0].astype(jnp.bfloat16))
    c_p = jnp.zeros((np_, DIM), jnp.float32).at[:N].set(c[0])

    # dense int8 adjacency mask adj[dst, src] (messages flow src -> dst), plus self loops.
    # TODO(synk): duplicate (multi-)edges collapse to one in the dense mask; PyG softmax counts them.
    # TODO(synk): cache / bit-pack this O(N^2) mask (or go block-sparse) for large graphs.
    src, dst = edge_index[0], edge_index[1]
    adj = jnp.zeros((np_, np_), jnp.int8).at[dst, src].set(1)
    adj = adj.at[jnp.arange(N), jnp.arange(N)].set(1)

    grid = (np_ // tm,)
    cparams = pltpu.CompilerParams(dimension_semantics=("parallel",),
                                   vmem_limit_bytes=vmem_limit)

    # ---- kernel 1: projection + folded attention scalars ----
    xw, scal = pl.pallas_call(
        _proj_kernel,
        grid=grid,
        in_specs=[pl.BlockSpec((tm, idp), lambda i: (i, 0)),
                  _const_spec((idp, DIM + 128))],
        out_specs=(pl.BlockSpec((tm, DIM), lambda i: (i, 0)),
                   pl.BlockSpec((tm, 128), lambda i: (i, 0))),
        out_shape=(jax.ShapeDtypeStruct((np_, DIM), jnp.bfloat16),
                   jax.ShapeDtypeStruct((np_, 128), jnp.float32)),
        compiler_params=cparams,
    )(x_p, params['wg_ext'])

    a_src_row = scal[:, 1].reshape(1, np_)    # a_src for every src node, as a lane-dense row

    # ---- kernel 2: masked softmax attention + aggregation + LSTM cell ----
    h_new, c_new = pl.pallas_call(
        _attn_lstm_kernel,
        grid=grid,
        in_specs=[pl.BlockSpec((tm, np_), lambda i: (i, 0)),        # adj tile (int8)
                  pl.BlockSpec((tm, 128), lambda i: (i, 0)),        # scal tile (a_dst in col 0)
                  _const_spec((1, np_)),                            # a_src row (all src)
                  _const_spec((np_, DIM)),                          # xw (all src rows, bf16)
                  _const_spec((1, DIM)),                            # GAT bias
                  pl.BlockSpec((tm, DIM), lambda i: (i, 0)),        # h tile (bf16)
                  pl.BlockSpec((tm, DIM), lambda i: (i, 0)),        # c tile (f32)
                  _const_spec((DIM, 4 * DIM)),                      # LSTM W_ih^T
                  _const_spec((DIM, 4 * DIM))],                     # LSTM W_hh^T
        out_specs=(pl.BlockSpec((tm, DIM), lambda i: (i, 0)),
                   pl.BlockSpec((tm, DIM), lambda i: (i, 0))),
        out_shape=(jax.ShapeDtypeStruct((np_, DIM), jnp.float32),
                   jax.ShapeDtypeStruct((np_, DIM), jnp.float32)),
        compiler_params=cparams,
    )(adj, scal, a_src_row, xw, params['bias'], h_p, c_p, params['w_ih_t'], params['w_hh_t'])

    x_out = h_new[:N]
    return x_out, (x_out[None], c_new[:N][None])   # x_out == new hidden state for seq len 1


if __name__ == "__main__":
    key = jax.random.PRNGKey(0)
    N, in_dim, E = 8, 32, 24
    k_x, k_e, k_h, k_c, k_p = jax.random.split(key, 5)

    x = jax.random.normal(k_x, (N, in_dim), jnp.float32)
    edge_index = jax.random.randint(k_e, (2, E), 0, N, dtype=jnp.int32)
    h = 0.1 * jax.random.normal(k_h, (1, N, DIM), jnp.float32)
    c = 0.1 * jax.random.normal(k_c, (1, N, DIM), jnp.float32)
    params = init_params(k_p, in_dim)

    x_out, (h_out, c_out) = geniepath_layer(x, edge_index, h, c, params)
    jax.block_until_ready((x_out, h_out, c_out))

    assert x_out.shape == (N, DIM)
    assert h_out.shape == (1, N, DIM) and c_out.shape == (1, N, DIM)
    assert bool(jnp.all(jnp.isfinite(x_out)))
    assert bool(jnp.all(jnp.isfinite(c_out)))
    print("KERNEL_OK")
</pallas_src>

<mosaic_0001>
module attributes {stable_mosaic.version = 11 : i64} {
  func.func @_proj_kernel(%arg0: i32, %arg1: memref<256x128xbf16, #tpu.memory_space<vmem>>, %arg2: memref<128x384xbf16, #tpu.memory_space<vmem>>, %arg3: memref<256x256xbf16, #tpu.memory_space<vmem>>, %arg4: memref<256x128xf32, #tpu.memory_space<vmem>>) attributes {dimension_semantics = [#tpu.dimension_semantics<parallel>], iteration_bounds = array<i64: 1>, scalar_prefetch = 0 : i64, scratch_operands = 0 : i64, tpu.core_type = #tpu.core_type<tc>, window_params = [{transform_indices = @transform_0, window_bounds = array<i64: 256, 128>}, {pipeline_mode = #tpu.pipeline_mode<synchronous>, transform_indices = @transform_1, window_bounds = array<i64: 128, 384>}, {transform_indices = @transform_2, window_bounds = array<i64: 256, 256>}, {transform_indices = @transform_3, window_bounds = array<i64: 256, 128>}]} {
    %c0 = arith.constant 0 : index
    %c0_0 = arith.constant 0 : index
    %0 = vector.load %arg1[%c0, %c0_0] : memref<256x128xbf16, #tpu.memory_space<vmem>>, vector<256x128xbf16>
    %c0_1 = arith.constant 0 : index
    %c0_2 = arith.constant 0 : index
    %1 = vector.load %arg2[%c0_1, %c0_2] : memref<128x384xbf16, #tpu.memory_space<vmem>>, vector<128x384xbf16>
    %cst = arith.constant dense<0.000000e+00> : vector<256x384xf32>
    %2 = tpu.matmul %0, %1, %cst {dimension_numbers = #tpu.dot_dimension_numbers<[1], [0], [0], [1], [0, 0, 1, 1], [], []>} : vector<256x128xbf16>, vector<128x384xbf16>, vector<256x384xf32> -> vector<256x384xf32>
    %3 = vector.extract_strided_slice %2 {offsets = [0, 0], sizes = [256, 256], strides = [1, 1]} : vector<256x384xf32> to vector<256x256xf32>
    %4 = arith.truncf %3 : vector<256x256xf32> to vector<256x256xbf16>
    %c0_3 = arith.constant 0 : index
    %c0_4 = arith.constant 0 : index
    %5 = vector.load %arg3[%c0_3, %c0_4] : memref<256x256xbf16, #tpu.memory_space<vmem>>, vector<256x256xbf16>
    tpu.vector_store %arg3[%c0_3, %c0_4], %4 {strides = array<i32>} : memref<256x256xbf16, #tpu.memory_space<vmem>>, vector<256x256xbf16>,
    %6 = vector.extract_strided_slice %2 {offsets = [0, 256], sizes = [256, 128], strides = [1, 1]} : vector<256x384xf32> to vector<256x128xf32>
    %c0_5 = arith.constant 0 : index
    %c0_6 = arith.constant 0 : index
    %7 = vector.load %arg4[%c0_5, %c0_6] : memref<256x128xf32, #tpu.memory_space<vmem>>, vector<256x128xf32>
    tpu.vector_store %arg4[%c0_5, %c0_6], %6 {strides = array<i32>} : memref<256x128xf32, #tpu.memory_space<vmem>>, vector<256x128xf32>,
    return
  }
  func.func @transform_0(%arg0: i32) -> (i32, i32) {
    %c0_i32 = arith.constant 0 : i32
    %c0_i32_0 = arith.constant 0 : i32
    return %arg0, %c0_i32 : i32, i32
  }
  func.func @transform_1(%arg0: i32) -> (i32, i32) {
    %c0_i32 = arith.constant 0 : i32
    %c0_i32_0 = arith.constant 0 : i32
    %c0_i32_1 = arith.constant 0 : i32
    return %c0_i32, %c0_i32_0 : i32, i32
  }
  func.func @transform_2(%arg0: i32) -> (i32, i32) {
    %c0_i32 = arith.constant 0 : i32
    %c0_i32_0 = arith.constant 0 : i32
    return %arg0, %c0_i32 : i32, i32
  }
  func.func @transform_3(%arg0: i32) -> (i32, i32) {
    %c0_i32 = arith.constant 0 : i32
    %c0_i32_0 = arith.constant 0 : i32
    return %arg0, %c0_i32 : i32, i32
  }
}

</mosaic_0001>

<llo_original>
// kernel: tpu_custom_call.1
$region0: #{tpu_custom_call.1}
  #allocation0 [shape = 'u32[]', space=smem, size = 0x4, offset = 0x4, fixed_abs, tag = 'smem constant byte address 0x4 - core index']
  #allocation1 [shape = 'u32[144,128]{1,0:T(1,128)}', space=vmem, size = 0x12000, scoped, tag = 'internal scratch']
  %s0 = inlined_call_operand.hbm [shape: bf16[256,128], index: 0, kind: input, shape index: {}]
  %s1 = inlined_call_operand.hbm [shape: bf16[128,384], index: 1, kind: input, shape index: {}]
  %s2 = inlined_call_operand.hbm [shape: bf16[256,256], index: 2, kind: output, shape index: {0}]
  %s3 = inlined_call_operand.hbm [shape: f32[256,128], index: 3, kind: output, shape index: {1}]
  %4 = xla_tuple %s2, %s3
  %s5 = sld [smem:[#allocation0]]
  $region34: #{tpu_custom_call.1} parent=0
    _
  %s7 = ssub.s32 1, %s5
  %s8 = scalar_select 0, %s7, %s5
  $region1: #{tpu_custom_call.1} parent=0
    #allocation2 [shape = 'u8[65536]{0}', space=vmem, size = 0x10000, scoped, tag = 'input window, operand 0, single buffered']
    #allocation3 [shape = 's32[1]{0}', space=sflag, size = 0x4, scoped, tag = 'scoped memory for tpu_custom_call.1']
    #allocation4 [shape = 's32[1]{0}', space=sflag, size = 0x4, scoped, tag = 'scoped memory for tpu_custom_call.1']
    #allocation5 [shape = 'u8[98304]{0}', space=vmem, size = 0x18000, scoped, tag = 'input window, operand 1, single buffered']
    #allocation6 [shape = 's32[1]{0}', space=sflag, size = 0x4, scoped, tag = 'scoped memory for tpu_custom_call.1']
    #allocation7 [shape = 'u8[131072]{0}', space=vmem, size = 0x20000, scoped, tag = 'output window, operand 0, single buffered']
    #allocation8 [shape = 'u8[131072]{0}', space=vmem, size = 0x20000, scoped, tag = 'output window, operand 1, single buffered']
    #allocation9 [shape = 's32[1]{0}', space=sflag, size = 0x4, scoped, tag = 'scoped memory for tpu_custom_call.1']
    %9 = vsyncpa [#allocation3], 0
    %10 = vsyncpa [#allocation6], 0
    %11 = vsyncpa [#allocation4], 0
    %12 = vsyncpa [#allocation9], 0
    // Predicated region
    $region2: #{tpu_custom_call.1} parent=1 // pred_check
      _
    $region3: #{tpu_custom_call.1} parent=1 // pred_check_branch
      %14 = sbr.rel (0) target = $region5
    $region4: #{tpu_custom_call.1} parent=1 // pred_region
      %s16 = ssub.s32 2048, 2048
      %17 = vsyncadd [#allocation3], %s16
      %s18 = sshll.u32 [#allocation2], 4
      %s19 = int_to_ptr.vmem [resolvable:$true] %s18
      %24 = dma.hbm_to_vmem [thread:$0]  %s0, 2048, %s19, [#allocation3], 64, 64, 4
    $region5: #{tpu_custom_call.1} parent=1 // pred_fallthru
      _
    // Predicated region
    $region6: #{tpu_custom_call.1} parent=1 // pred_check
      _
    $region7: #{tpu_custom_call.1} parent=1 // pred_check_branch
      %26 = sbr.rel (0) target = $region9
    $region8: #{tpu_custom_call.1} parent=1 // pred_region
      %s28 = ssub.s32 3072, 3072
      %29 = vsyncadd [#allocation6], %s28
      %s30 = sshll.u32 [#allocation5], 4
      %s31 = int_to_ptr.vmem [resolvable:$true] %s30
      %36 = dma.hbm_to_vmem [thread:$0]  %s1, 3072, %s31, [#allocation6], 192, 192, 12
    $region9: #{tpu_custom_call.1} parent=1 // pred_fallthru
      _
    // Predicated region
    $region10: #{tpu_custom_call.1} parent=1 // pred_check
      _
    $region11: #{tpu_custom_call.1} parent=1 // pred_check_branch
      %38 = sbr.rel (0) target = $region13
    $region12: #{tpu_custom_call.1} parent=1 // pred_region
      %39 = dma.done [#allocation3], 2048
    $region13: #{tpu_custom_call.1} parent=1 // pred_fallthru
      _
    // Predicated region
    $region14: #{tpu_custom_call.1} parent=1 // pred_check
      _
    $region15: #{tpu_custom_call.1} parent=1 // pred_check_branch
      %41 = sbr.rel (0) target = $region17
    $region16: #{tpu_custom_call.1} parent=1 // pred_region
      %42 = dma.done [#allocation6], 3072
    $region17: #{tpu_custom_call.1} parent=1 // pred_fallthru
      _
    %v44 = vld [vmem:[#allocation2] sm:$0xf]
    %v45 = vld [vmem:[#allocation2 + $0x4] sm:$0xf]
    %v46 = vld [vmem:[#allocation2 + $0x8] sm:$0xf]
    %v47 = vld [vmem:[#allocation2 + $0xc] sm:$0xf]
    %v48 = vld [vmem:[#allocation2 + $0x10] sm:$0xf]
    %v49 = vld [vmem:[#allocation2 + $0x14] sm:$0xf]
    %v50 = vld [vmem:[#allocation2 + $0x18] sm:$0xf]
    %v51 = vld [vmem:[#allocation2 + $0x1c] sm:$0xf]
    %v52 = vld [vmem:[#allocation2 + $0x20] sm:$0xf]
    %v53 = vld [vmem:[#allocation2 + $0x24] sm:$0xf]
    %v54 = vld [vmem:[#allocation2 + $0x28] sm:$0xf]
    %v55 = vld [vmem:[#allocation2 + $0x2c] sm:$0xf]
    %v56 = vld [vmem:[#allocation2 + $0x30] sm:$0xf]
    %v57 = vld [vmem:[#allocation2 + $0x34] sm:$0xf]
    %v58 = vld [vmem:[#allocation2 + $0x38] sm:$0xf]
    %v59 = vld [vmem:[#allocation2 + $0x3c] sm:$0xf]
    %v60 = vld [vmem:[#allocation2 + $0x40] sm:$0xf]
    %v61 = vld [vmem:[#allocation2 + $0x44] sm:$0xf]
    %v62 = vld [vmem:[#allocation2 + $0x48] sm:$0xf]
    %v63 = vld [vmem:[#allocation2 + $0x4c] sm:$0xf]
    %v64 = vld [vmem:[#allocation2 + $0x50] sm:$0xf]
    %v65 = vld [vmem:[#allocation2 + $0x54] sm:$0xf]
    %v66 = vld [vmem:[#allocation2 + $0x58] sm:$0xf]
    %v67 = vld [vmem:[#allocation2 + $0x5c] sm:$0xf]
    %v68 = vld [vmem:[#allocation2 + $0x60] sm:$0xf]
    %v69 = vld [vmem:[#allocation2 + $0x64] sm:$0xf]
    %v70 = vld [vmem:[#allocation2 + $0x68] sm:$0xf]
    %v71 = vld [vmem:[#allocation2 + $0x6c] sm:$0xf]
    %v72 = vld [vmem:[#allocation2 + $0x70] sm:$0xf]
    %v73 = vld [vmem:[#allocation2 + $0x74] sm:$0xf]
    %v74 = vld [vmem:[#allocation2 + $0x78] sm:$0xf]
    %v75 = vld [vmem:[#allocation2 + $0x7c] sm:$0xf]
    %v76 = vld [vmem:[#allocation5] sm:$0xff]
    %v77 = vld [vmem:[#allocation5 + $0x8] sm:$0xf]
    %v78 = vld [vmem:[#allocation5 + $0xc] sm:$0xff]
    %v79 = vld [vmem:[#allocation5 + $0x14] sm:$0xf]
    %v80 = vld [vmem:[#allocation5 + $0x18] sm:$0xff]
    %v81 = vld [vmem:[#allocation5 + $0x20] sm:$0xf]
    %v82 = vld [vmem:[#allocation5 + $0x24] sm:$0xff]
    %v83 = vld [vmem:[#allocation5 + $0x2c] sm:$0xf]
    %v84 = vld [vmem:[#allocation5 + $0x30] sm:$0xff]
    %v85 = vld [vmem:[#allocation5 + $0x38] sm:$0xf]
    %v86 = vld [vmem:[#allocation5 + $0x3c] sm:$0xff]
    %v87 = vld [vmem:[#allocation5 + $0x44] sm:$0xf]
    %v88 = vld [vmem:[#allocation5 + $0x48] sm:$0xff]
    %v89 = vld [vmem:[#allocation5 + $0x50] sm:$0xf]
    %v90 = vld [vmem:[#allocation5 + $0x54] sm:$0xff]
    %v91 = vld [vmem:[#allocation5 + $0x5c] sm:$0xf]
    %v92 = vld [vmem:[#allocation5 + $0x60] sm:$0xff]
    %v93 = vld [vmem:[#allocation5 + $0x68] sm:$0xf]
    %v94 = vld [vmem:[#allocation5 + $0x6c] sm:$0xff]
    %v95 = vld [vmem:[#allocation5 + $0x74] sm:$0xf]
    %v96 = vld [vmem:[#allocation5 + $0x78] sm:$0xff]
    %v97 = vld [vmem:[#allocation5 + $0x80] sm:$0xf]
    %v98 = vld [vmem:[#allocation5 + $0x84] sm:$0xff]
    %v99 = vld [vmem:[#allocation5 + $0x8c] sm:$0xf]
    %v100 = vld [vmem:[#allocation5 + $0x90] sm:$0xff]
    %v101 = vld [vmem:[#allocation5 + $0x98] sm:$0xf]
    %v102 = vld [vmem:[#allocation5 + $0x9c] sm:$0xff]
    %v103 = vld [vmem:[#allocation5 + $0xa4] sm:$0xf]
    %v104 = vld [vmem:[#allocation5 + $0xa8] sm:$0xff]
    %v105 = vld [vmem:[#allocation5 + $0xb0] sm:$0xf]
    %v106 = vld [vmem:[#allocation5 + $0xb4] sm:$0xff]
    %v107 = vld [vmem:[#allocation5 + $0xbc] sm:$0xf]
    %v140 = vunpack.c.l.b16 %v44
    %v141 = vunpack.c.l.b16 %v45
    %v142 = vunpack.c.l.b16 %v46
    %v143 = vunpack.c.l.b16 %v47
    %v144 = vunpack.c.l.b16 %v48
    %v145 = vunpack.c.l.b16 %v49
    %v146 = vunpack.c.l.b16 %v50
    %v147 = vunpack.c.l.b16 %v51
    %v148 = vunpack.c.l.b16 %v52
    %v149 = vunpack.c.l.b16 %v53
    %v150 = vunpack.c.l.b16 %v54
    %v151 = vunpack.c.l.b16 %v55
    %v152 = vunpack.c.l.b16 %v56
    %v153 = vunpack.c.l.b16 %v57
    %v154 = vunpack.c.l.b16 %v58
    %v155 = vunpack.c.l.b16 %v59
    %v156 = vunpack.c.l.b16 %v60
    %v157 = vunpack.c.l.b16 %v61
    %v158 = vunpack.c.l.b16 %v62
    %v159 = vunpack.c.l.b16 %v63
    %v160 = vunpack.c.l.b16 %v64
    %v161 = vunpack.c.l.b16 %v65
    %v162 = vunpack.c.l.b16 %v66
    %v163 = vunpack.c.l.b16 %v67
    %v164 = vunpack.c.l.b16 %v68
    %v165 = vunpack.c.l.b16 %v69
    %v166 = vunpack.c.l.b16 %v70
    %v167 = vunpack.c.l.b16 %v71
    %v168 = vunpack.c.l.b16 %v72
    %v169 = vunpack.c.l.b16 %v73
    %v170 = vunpack.c.l.b16 %v74
    %v171 = vunpack.c.l.b16 %v75
    %v172 = vpack.c.b16 %v141, %v140
    %v173 = vpack.c.b16 %v143, %v142
    %v174 = vpack.c.b16 %v145, %v144
    %v175 = vpack.c.b16 %v147, %v146
    %v176 = vpack.c.b16 %v149, %v148
    %v177 = vpack.c.b16 %v151, %v150
    %v178 = vpack.c.b16 %v153, %v152
    %v179 = vpack.c.b16 %v155, %v154
    %v180 = vpack.c.b16 %v157, %v156
    %v181 = vpack.c.b16 %v159, %v158
    %v182 = vpack.c.b16 %v161, %v160
    %v183 = vpack.c.b16 %v163, %v162
    %v184 = vpack.c.b16 %v165, %v164
    %v185 = vpack.c.b16 %v167, %v166
    %v186 = vpack.c.b16 %v169, %v168
    %v187 = vpack.c.b16 %v171, %v170
    %v236 = vunpack.c.l.b16 %v76
    %v237 = vunpack.c.h.b16 %v76
    %v238 = vunpack.c.l.b16 %v77
    %v239 = vunpack.c.l.b16 %v78
    %v240 = vunpack.c.h.b16 %v78
    %v241 = vunpack.c.l.b16 %v79
    %v242 = vunpack.c.l.b16 %v80
    %v243 = vunpack.c.h.b16 %v80
    %v244 = vunpack.c.l.b16 %v81
    %v245 = vunpack.c.l.b16 %v82
    %v246 = vunpack.c.h.b16 %v82
    %v247 = vunpack.c.l.b16 %v83
    %v248 = vunpack.c.l.b16 %v84
    %v249 = vunpack.c.h.b16 %v84
    %v250 = vunpack.c.l.b16 %v85
    %v251 = vunpack.c.l.b16 %v86
    %v252 = vunpack.c.h.b16 %v86
    %v253 = vunpack.c.l.b16 %v87
    %v254 = vunpack.c.l.b16 %v88
    %v255 = vunpack.c.h.b16 %v88
    %v256 = vunpack.c.l.b16 %v89
    %v257 = vunpack.c.l.b16 %v90
    %v258 = vunpack.c.h.b16 %v90
    %v259 = vunpack.c.l.b16 %v91
    %v260 = vunpack.c.l.b16 %v92
    %v261 = vunpack.c.h.b16 %v92
    %v262 = vunpack.c.l.b16 %v93
    %v263 = vunpack.c.l.b16 %v94
    %v264 = vunpack.c.h.b16 %v94
    %v265 = vunpack.c.l.b16 %v95
    %v266 = vunpack.c.l.b16 %v96
    %v267 = vunpack.c.h.b16 %v96
    %v268 = vunpack.c.l.b16 %v97
    %v269 = vunpack.c.l.b16 %v98
    %v270 = vunpack.c.h.b16 %v98
    %v271 = vunpack.c.l.b16 %v99
    %v272 = vunpack.c.l.b16 %v100
    %v273 = vunpack.c.h.b16 %v100
    %v274 = vunpack.c.l.b16 %v101
    %v275 = vunpack.c.l.b16 %v102
    %v276 = vunpack.c.h.b16 %v102
    %v277 = vunpack.c.l.b16 %v103
    %v278 = vunpack.c.l.b16 %v104
    %v279 = vunpack.c.h.b16 %v104
    %v280 = vunpack.c.l.b16 %v105
    %v281 = vunpack.c.l.b16 %v106
    %v282 = vunpack.c.h.b16 %v106
    %v283 = vunpack.c.l.b16 %v107
    %v284 = vpack.c.b16 %v239, %v236
    %v285 = vpack.c.b16 %v240, %v237
    %v286 = vpack.c.b16 %v241, %v238
    %v287 = vpack.c.b16 %v245, %v242
    %v288 = vpack.c.b16 %v246, %v243
    %v289 = vpack.c.b16 %v247, %v244
    %v290 = vpack.c.b16 %v251, %v248
    %v291 = vpack.c.b16 %v252, %v249
    %v292 = vpack.c.b16 %v253, %v250
    %v293 = vpack.c.b16 %v257, %v254
    %v294 = vpack.c.b16 %v258, %v255
    %v295 = vpack.c.b16 %v259, %v256
    %v296 = vpack.c.b16 %v263, %v260
    %v297 = vpack.c.b16 %v264, %v261
    %v298 = vpack.c.b16 %v265, %v262
    %v299 = vpack.c.b16 %v269, %v266
    %v300 = vpack.c.b16 %v270, %v267
    %v301 = vpack.c.b16 %v271, %v268
    %v302 = vpack.c.b16 %v275, %v272
    %v303 = vpack.c.b16 %v276, %v273
    %v304 = vpack.c.b16 %v277, %v274
    %v305 = vpack.c.b16 %v281, %v278
    %v306 = vpack.c.b16 %v282, %v279
    %v307 = vpack.c.b16 %v283, %v280
    %332 = vmatprep.subr.bf16.mxu0 %v285
    %333 = vmatpush1.bf16.msra.mxu0 %v284
    %334 = vmatprep.subr.bf16.mxu0 %v288
    %335 = vmatpush1.bf16.msra.mxu0 %v287
    %336 = vmatprep.subr.bf16.mxu0 %v291
    %337 = vmatpush1.bf16.msra.mxu0 %v290
    %338 = vmatprep.subr.bf16.mxu0 %v294
    %339 = vmatpush1.bf16.msra.mxu0 %v293
    %340 = vmatprep.subr.bf16.mxu0 %v297
    %341 = vmatpush1.bf16.msra.mxu0 %v296
    %342 = vmatprep.subr.bf16.mxu0 %v300
    %343 = vmatpush1.bf16.msra.mxu0 %v299
    %344 = vmatprep.subr.bf16.mxu0 %v303
    %345 = vmatpush1.bf16.msra.mxu0 %v302
    %346 = vmatprep.subr.bf16.mxu0 %v306
    %347 = vmatpush1.bf16.msra.mxu0 %v305
    %348 = vmatprep.subr.bf16.mxu0 0
    %349 = vmatpush1.bf16.msra.mxu0 0
    %350 = vmatprep.subr.bf16.mxu0 0
    %351 = vmatpush1.bf16.msra.mxu0 0
    %352 = vmatprep.subr.bf16.mxu0 0
    %353 = vmatpush1.bf16.msra.mxu0 0
    %354 = vmatprep.subr.bf16.mxu0 0
    %355 = vmatpush1.bf16.msra.mxu0 0
    %356 = vmatprep.subr.bf16.mxu0 0
    %357 = vmatpush1.bf16.msra.mxu0 0
    %358 = vmatprep.subr.bf16.mxu0 0
    %359 = vmatpush1.bf16.msra.mxu0 0
    %360 = vmatprep.subr.bf16.mxu0 0
    %361 = vmatpush1.bf16.msra.mxu0 0
    %362 = vmatprep.subr.bf16.mxu0 0
    %363 = vmatpush1.bf16.msra.mxu0 0
    %364 = vmatprep.mubr.bf16.mxu0 0
    %365 = vmatmul.mubr.bf16.gmra.mrb[0].mxu0 %v172
    %v366 = vpop.f32.mrb[0].mxu0
    %v367 = vadd.f32 0.0, %v366
    %v368 = vpop.f32.mrb[0].mxu0
    %v369 = vadd.f32 0.0, %v368
    %v370 = vpop.f32.mrb[0].mxu0
    %v371 = vadd.f32 0.0, %v370
    %v372 = vpop.f32.mrb[0].mxu0
    %v373 = vadd.f32 0.0, %v372
    %374 = vmatprep.mubr.bf16.mxu0 0
    %375 = vmatmul.mubr.bf16.gmra.mrb[0].mxu0 %v173
    %v376 = vpop.f32.mrb[0].mxu0
    %v377 = vadd.f32 0.0, %v376
    %v378 = vpop.f32.mrb[0].mxu0
    %v379 = vadd.f32 0.0, %v378
    %v380 = vpop.f32.mrb[0].mxu0
    %v381 = vadd.f32 0.0, %v380
    %v382 = vpop.f32.mrb[0].mxu0
    %v383 = vadd.f32 0.0, %v382
    %384 = vmatprep.mubr.bf16.mxu0 0
    %385 = vmatmul.mubr.bf16.gmra.mrb[0].mxu0 %v174
    %v386 = vpop.f32.mrb[0].mxu0
    %v387 = vadd.f32 0.0, %v386
    %v388 = vpop.f32.mrb[0].mxu0
    %v389 = vadd.f32 0.0, %v388
    %v390 = vpop.f32.mrb[0].mxu0
    %v391 = vadd.f32 0.0, %v390
    %v392 = vpop.f32.mrb[0].mxu0
    %v393 = vadd.f32 0.0, %v392
    %394 = vmatprep.mubr.bf16.mxu0 0
    %395 = vmatmul.mubr.bf16.gmra.mrb[0].mxu0 %v175
    %v396 = vpop.f32.mrb[0].mxu0
    %v397 = vadd.f32 0.0, %v396
    %v398 = vpop.f32.mrb[0].mxu0
    %v399 = vadd.f32 0.0, %v398
    %v400 = vpop.f32.mrb[0].mxu0
    %v401 = vadd.f32 0.0, %v400
    %v402 = vpop.f32.mrb[0].mxu0
    %v403 = vadd.f32 0.0, %v402
    %404 = vmatprep.mubr.bf16.mxu0 0
    %405 = vmatmul.mubr.bf16.gmra.mrb[0].mxu0 %v176
    %v406 = vpop.f32.mrb[0].mxu0
    %v407 = vadd.f32 0.0, %v406
    %v408 = vpop.f32.mrb[0].mxu0
    %v409 = vadd.f32 0.0, %v408
    %v410 = vpop.f32.mrb[0].mxu0
    %v411 = vadd.f32 0.0, %v410
    %v412 = vpop.f32.mrb[0].mxu0
    %v413 = vadd.f32 0.0, %v412
    %414 = vmatprep.mubr.bf16.mxu0 0
    %415 = vmatmul.mubr.bf16.gmra.mrb[0].mxu0 %v177
    %v416 = vpop.f32.mrb[0].mxu0
    %v417 = vadd.f32 0.0, %v416
    %v418 = vpop.f32.mrb[0].mxu0
    %v419 = vadd.f32 0.0, %v418
    %v420 = vpop.f32.mrb[0].mxu0
    %v421 = vadd.f32 0.0, %v420
    %v422 = vpop.f32.mrb[0].mxu0
    %v423 = vadd.f32 0.0, %v422
    %424 = vmatprep.mubr.bf16.mxu0 0
    %425 = vmatmul.mubr.bf16.gmra.mrb[0].mxu0 %v178
    %v426 = vpop.f32.mrb[0].mxu0
    %v427 = vadd.f32 0.0, %v426
    %v428 = vpop.f32.mrb[0].mxu0
    %v429 = vadd.f32 0.0, %v428
    %v430 = vpop.f32.mrb[0].mxu0
    %v431 = vadd.f32 0.0, %v430
    %v432 = vpop.f32.mrb[0].mxu0
    %v433 = vadd.f32 0.0, %v432
    %434 = vmatprep.mubr.bf16.mxu0 0
    %435 = vmatmul.mubr.bf16.gmra.mrb[0].mxu0 %v179
    %v436 = vpop.f32.mrb[0].mxu0
    %v437 = vadd.f32 0.0, %v436
    %v438 = vpop.f32.mrb[0].mxu0
    %v439 = vadd.f32 0.0, %v438
    %v440 = vpop.f32.mrb[0].mxu0
    %v441 = vadd.f32 0.0, %v440
    %v442 = vpop.f32.mrb[0].mxu0
    %v443 = vadd.f32 0.0, %v442
    %444 = vmatprep.mubr.bf16.mxu0 0
    %445 = vmatmul.mubr.bf16.gmra.mrb[0].mxu0 %v180
    %v446 = vpop.f32.mrb[0].mxu0
    %v447 = vadd.f32 0.0, %v446
    %v448 = vpop.f32.mrb[0].mxu0
    %v449 = vadd.f32 0.0, %v448
    %v450 = vpop.f32.mrb[0].mxu0
    %v451 = vadd.f32 0.0, %v450
    %v452 = vpop.f32.mrb[0].mxu0
    %v453 = vadd.f32 0.0, %v452
    %454 = vmatprep.mubr.bf16.mxu0 0
    %455 = vmatmul.mubr.bf16.gmra.mrb[0].mxu0 %v181
    %v456 = vpop.f32.mrb[0].mxu0
    %v457 = vadd.f32 0.0, %v456
    %v458 = vpop.f32.mrb[0].mxu0
    %v459 = vadd.f32 0.0, %v458
    %v460 = vpop.f32.mrb[0].mxu0
    %v461 = vadd.f32 0.0, %v460
    %v462 = vpop.f32.mrb[0].mxu0
    %v463 = vadd.f32 0.0, %v462
    %464 = vmatprep.mubr.bf16.mxu0 0
    %465 = vmatmul.mubr.bf16.gmra.mrb[0].mxu0 %v182
    %v466 = vpop.f32.mrb[0].mxu0
    %v467 = vadd.f32 0.0, %v466
    %v468 = vpop.f32.mrb[0].mxu0
    %v469 = vadd.f32 0.0, %v468
    %v470 = vpop.f32.mrb[0].mxu0
    %v471 = vadd.f32 0.0, %v470
    %v472 = vpop.f32.mrb[0].mxu0
    %v473 = vadd.f32 0.0, %v472
    %474 = vmatprep.mubr.bf16.mxu0 0
    %475 = vmatmul.mubr.bf16.gmra.mrb[0].mxu0 %v183
    %v476 = vpop.f32.mrb[0].mxu0
    %v477 = vadd.f32 0.0, %v476
    %v478 = vpop.f32.mrb[0].mxu0
    %v479 = vadd.f32 0.0, %v478
    %v480 = vpop.f32.mrb[0].mxu0
    %v481 = vadd.f32 0.0, %v480
    %v482 = vpop.f32.mrb[0].mxu0
    %v483 = vadd.f32 0.0, %v482
    %484 = vmatprep.mubr.bf16.mxu0 0
    %485 = vmatmul.mubr.bf16.gmra.mrb[0].mxu0 %v184
    %v486 = vpop.f32.mrb[0].mxu0
    %v487 = vadd.f32 0.0, %v486
    %v488 = vpop.f32.mrb[0].mxu0
    %v489 = vadd.f32 0.0, %v488
    %v490 = vpop.f32.mrb[0].mxu0
    %v491 = vadd.f32 0.0, %v490
    %v492 = vpop.f32.mrb[0].mxu0
    %v493 = vadd.f32 0.0, %v492
    %494 = vmatprep.mubr.bf16.mxu0 0
    %495 = vmatmul.mubr.bf16.gmra.mrb[0].mxu0 %v185
    %v496 = vpop.f32.mrb[0].mxu0
    %v497 = vadd.f32 0.0, %v496
    %v498 = vpop.f32.mrb[0].mxu0
    %v499 = vadd.f32 0.0, %v498
    %v500 = vpop.f32.mrb[0].mxu0
    %v501 = vadd.f32 0.0, %v500
    %v502 = vpop.f32.mrb[0].mxu0
    %v503 = vadd.f32 0.0, %v502
    %504 = vmatprep.mubr.bf16.mxu0 0
    %505 = vmatmul.mubr.bf16.gmra.mrb[0].mxu0 %v186
    %v506 = vpop.f32.mrb[0].mxu0
    %v507 = vadd.f32 0.0, %v506
    %v508 = vpop.f32.mrb[0].mxu0
    %v509 = vadd.f32 0.0, %v508
    %v510 = vpop.f32.mrb[0].mxu0
    %v511 = vadd.f32 0.0, %v510
    %v512 = vpop.f32.mrb[0].mxu0
    %v513 = vadd.f32 0.0, %v512
    %514 = vmatprep.mubr.bf16.mxu0 0
    %515 = vmatmul.mubr.bf16.gmra.mrb[0].mxu0 %v187
    %v516 = vpop.f32.mrb[0].mxu0
    %v517 = vadd.f32 0.0, %v516
    %v518 = vpop.f32.mrb[0].mxu0
    %v519 = vadd.f32 0.0, %v518
    %v520 = vpop.f32.mrb[0].mxu0
    %v521 = vadd.f32 0.0, %v520
    %v522 = vpop.f32.mrb[0].mxu0
    %v523 = vadd.f32 0.0, %v522
    %524 = vdwg.mxu0
    %525 = vmatprep.subr.bf16.mxu0 0
    %526 = vmatpush1.bf16.msra.mxu0 %v286
    %527 = vmatprep.subr.bf16.mxu0 0
    %528 = vmatpush1.bf16.msra.mxu0 %v289
    %529 = vmatprep.subr.bf16.mxu0 0
    %530 = vmatpush1.bf16.msra.mxu0 %v292
    %531 = vmatprep.subr.bf16.mxu0 0
    %532 = vmatpush1.bf16.msra.mxu0 %v295
    %533 = vmatprep.subr.bf16.mxu0 0
    %534 = vmatpush1.bf16.msra.mxu0 %v298
    %535 = vmatprep.subr.bf16.mxu0 0
    %536 = vmatpush1.bf16.msra.mxu0 %v301
    %537 = vmatprep.subr.bf16.mxu0 0
    %538 = vmatpush1.bf16.msra.mxu0 %v304
    %539 = vmatprep.subr.bf16.mxu0 0
    %540 = vmatpush1.bf16.msra.mxu0 %v307
    %541 = vmatprep.subr.bf16.mxu0 0
    %542 = vmatpush1.bf16.msra.mxu0 0
    %543 = vmatprep.subr.bf16.mxu0 0
    %544 = vmatpush1.bf16.msra.mxu0 0
    %545 = vmatprep.subr.bf16.mxu0 0
    %546 = vmatpush1.bf16.msra.mxu0 0
    %547 = vmatprep.subr.bf16.mxu0 0
    %548 = vmatpush1.bf16.msra.mxu0 0
    %549 = vmatprep.subr.bf16.mxu0 0
    %550 = vmatpush1.bf16.msra.mxu0 0
    %551 = vmatprep.subr.bf16.mxu0 0
    %552 = vmatpush1.bf16.msra.mxu0 0
    %553 = vmatprep.subr.bf16.mxu0 0
    %554 = vmatpush1.bf16.msra.mxu0 0
    %555 = vmatprep.subr.bf16.mxu0 0
    %556 = vmatpush1.bf16.msra.mxu0 0
    %557 = vmatprep.mubr.bf16.mxu0 0
    %558 = vmatmul.mubr.bf16.gmra.mrb[0].mxu0 %v172
    %v559 = vpop.f32.mrb[0].mxu0
    %v560 = vadd.f32 0.0, %v559
    %v561 = vpop.f32.mrb[0].mxu0
    %v562 = vpop.f32.mrb[0].mxu0
    %v563 = vadd.f32 0.0, %v562
    %v564 = vpop.f32.mrb[0].mxu0
    %565 = vmatprep.mubr.bf16.mxu0 0
    %566 = vmatmul.mubr.bf16.gmra.mrb[0].mxu0 %v173
    %v567 = vpop.f32.mrb[0].mxu0
    %v568 = vadd.f32 0.0, %v567
    %v569 = vpop.f32.mrb[0].mxu0
    %v570 = vpop.f32.mrb[0].mxu0
    %v571 = vadd.f32 0.0, %v570
    %v572 = vpop.f32.mrb[0].mxu0
    %573 = vmatprep.mubr.bf16.mxu0 0
    %574 = vmatmul.mubr.bf16.gmra.mrb[0].mxu0 %v174
    %v575 = vpop.f32.mrb[0].mxu0
    %v576 = vadd.f32 0.0, %v575
    %v577 = vpop.f32.mrb[0].mxu0
    %v578 = vpop.f32.mrb[0].mxu0
    %v579 = vadd.f32 0.0, %v578
    %v580 = vpop.f32.mrb[0].mxu0
    %581 = vmatprep.mubr.bf16.mxu0 0
    %582 = vmatmul.mubr.bf16.gmra.mrb[0].mxu0 %v175
    %v583 = vpop.f32.mrb[0].mxu0
    %v584 = vadd.f32 0.0, %v583
    %v585 = vpop.f32.mrb[0].mxu0
    %v586 = vpop.f32.mrb[0].mxu0
    %v587 = vadd.f32 0.0, %v586
    %v588 = vpop.f32.mrb[0].mxu0
    %589 = vmatprep.mubr.bf16.mxu0 0
    %590 = vmatmul.mubr.bf16.gmra.mrb[0].mxu0 %v176
    %v591 = vpop.f32.mrb[0].mxu0
    %v592 = vadd.f32 0.0, %v591
    %v593 = vpop.f32.mrb[0].mxu0
    %v594 = vpop.f32.mrb[0].mxu0
    %v595 = vadd.f32 0.0, %v594
    %v596 = vpop.f32.mrb[0].mxu0
    %597 = vmatprep.mubr.bf16.mxu0 0
    %598 = vmatmul.mubr.bf16.gmra.mrb[0].mxu0 %v177
    %v599 = vpop.f32.mrb[0].mxu0
    %v600 = vadd.f32 0.0, %v599
    %v601 = vpop.f32.mrb[0].mxu0
    %v602 = vpop.f32.mrb[0].mxu0
    %v603 = vadd.f32 0.0, %v602
    %v604 = vpop.f32.mrb[0].mxu0
    %605 = vmatprep.mubr.bf16.mxu0 0
    %606 = vmatmul.mubr.bf16.gmra.mrb[0].mxu0 %v178
    %v607 = vpop.f32.mrb[0].mxu0
    %v608 = vadd.f32 0.0, %v607
    %v609 = vpop.f32.mrb[0].mxu0
    %v610 = vpop.f32.mrb[0].mxu0
    %v611 = vadd.f32 0.0, %v610
    %v612 = vpop.f32.mrb[0].mxu0
    %613 = vmatprep.mubr.bf16.mxu0 0
    %614 = vmatmul.mubr.bf16.gmra.mrb[0].mxu0 %v179
    %v615 = vpop.f32.mrb[0].mxu0
    %v616 = vadd.f32 0.0, %v615
    %v617 = vpop.f32.mrb[0].mxu0
    %v618 = vpop.f32.mrb[0].mxu0
    %v619 = vadd.f32 0.0, %v618
    %v620 = vpop.f32.mrb[0].mxu0
    %621 = vmatprep.mubr.bf16.mxu0 0
    %622 = vmatmul.mubr.bf16.gmra.mrb[0].mxu0 %v180
    %v623 = vpop.f32.mrb[0].mxu0
    %v624 = vadd.f32 0.0, %v623
    %v625 = vpop.f32.mrb[0].mxu0
    %v626 = vpop.f32.mrb[0].mxu0
    %v627 = vadd.f32 0.0, %v626
    %v628 = vpop.f32.mrb[0].mxu0
    %629 = vmatprep.mubr.bf16.mxu0 0
    %630 = vmatmul.mubr.bf16.gmra.mrb[0].mxu0 %v181
    %v631 = vpop.f32.mrb[0].mxu0
    %v632 = vadd.f32 0.0, %v631
    %v633 = vpop.f32.mrb[0].mxu0
    %v634 = vpop.f32.mrb[0].mxu0
    %v635 = vadd.f32 0.0, %v634
    %v636 = vpop.f32.mrb[0].mxu0
    %637 = vmatprep.mubr.bf16.mxu0 0
    %638 = vmatmul.mubr.bf16.gmra.mrb[0].mxu0 %v182
    %v639 = vpop.f32.mrb[0].mxu0
    %v640 = vadd.f32 0.0, %v639
    %v641 = vpop.f32.mrb[0].mxu0
    %v642 = vpop.f32.mrb[0].mxu0
    %v643 = vadd.f32 0.0, %v642
    %v644 = vpop.f32.mrb[0].mxu0
    %645 = vmatprep.mubr.bf16.mxu0 0
    %646 = vmatmul.mubr.bf16.gmra.mrb[0].mxu0 %v183
    %v647 = vpop.f32.mrb[0].mxu0
    %v648 = vadd.f32 0.0, %v647
    %v649 = vpop.f32.mrb[0].mxu0
    %v650 = vpop.f32.mrb[0].mxu0
    %v651 = vadd.f32 0.0, %v650
    %v652 = vpop.f32.mrb[0].mxu0
    %653 = vmatprep.mubr.bf16.mxu0 0
    %654 = vmatmul.mubr.bf16.gmra.mrb[0].mxu0 %v184
    %v655 = vpop.f32.mrb[0].mxu0
    %v656 = vadd.f32 0.0, %v655
    %v657 = vpop.f32.mrb[0].mxu0
    %v658 = vpop.f32.mrb[0].mxu0
    %v659 = vadd.f32 0.0, %v658
    %v660 = vpop.f32.mrb[0].mxu0
    %661 = vmatprep.mubr.bf16.mxu0 0
    %662 = vmatmul.mubr.bf16.gmra.mrb[0].mxu0 %v185
    %v663 = vpop.f32.mrb[0].mxu0
    %v664 = vadd.f32 0.0, %v663
    %v665 = vpop.f32.mrb[0].mxu0
    %v666 = vpop.f32.mrb[0].mxu0
    %v667 = vadd.f32 0.0, %v666
    %v668 = vpop.f32.mrb[0].mxu0
    %669 = vmatprep.mubr.bf16.mxu0 0
    %670 = vmatmul.mubr.bf16.gmra.mrb[0].mxu0 %v186
    %v671 = vpop.f32.mrb[0].mxu0
    %v672 = vadd.f32 0.0, %v671
    %v673 = vpop.f32.mrb[0].mxu0
    %v674 = vpop.f32.mrb[0].mxu0
    %v675 = vadd.f32 0.0, %v674
    %v676 = vpop.f32.mrb[0].mxu0
    %677 = vmatprep.mubr.bf16.mxu0 0
    %678 = vmatmul.mubr.bf16.gmra.mrb[0].mxu0 %v187
    %v679 = vpop.f32.mrb[0].mxu0
    %v680 = vadd.f32 0.0, %v679
    %v681 = vpop.f32.mrb[0].mxu0
    %v682 = vpop.f32.mrb[0].mxu0
    %v683 = vadd.f32 0.0, %v682
    %v684 = vpop.f32.mrb[0].mxu0
    %685 = vdwg.mxu0
    %v686 = vpack.c.bf16 %v371, %v367
    %v687 = vpack.c.bf16 %v373, %v369
    %v688 = vpack.c.bf16 %v381, %v377
    %v689 = vpack.c.bf16 %v383, %v379
    %v690 = vpack.c.bf16 %v391, %v387
    %v691 = vpack.c.bf16 %v393, %v389
    %v692 = vpack.c.bf16 %v401, %v397
    %v693 = vpack.c.bf16 %v403, %v399
    %v694 = vpack.c.bf16 %v411, %v407
    %v695 = vpack.c.bf16 %v413, %v409
    %v696 = vpack.c.bf16 %v421, %v417
    %v697 = vpack.c.bf16 %v423, %v419
    %v698 = vpack.c.bf16 %v431, %v427
    %v699 = vpack.c.bf16 %v433, %v429
    %v700 = vpack.c.bf16 %v441, %v437
    %v701 = vpack.c.bf16 %v443, %v439
    %v702 = vpack.c.bf16 %v451, %v447
    %v703 = vpack.c.bf16 %v453, %v449
    %v704 = vpack.c.bf16 %v461, %v457
    %v705 = vpack.c.bf16 %v463, %v459
    %v706 = vpack.c.bf16 %v471, %v467
    %v707 = vpack.c.bf16 %v473, %v469
    %v708 = vpack.c.bf16 %v481, %v477
    %v709 = vpack.c.bf16 %v483, %v479
    %v710 = vpack.c.bf16 %v491, %v487
    %v711 = vpack.c.bf16 %v493, %v489
    %v712 = vpack.c.bf16 %v501, %v497
    %v713 = vpack.c.bf16 %v503, %v499
    %v714 = vpack.c.bf16 %v511, %v507
    %v715 = vpack.c.bf16 %v513, %v509
    %v716 = vpack.c.bf16 %v521, %v517
    %v717 = vpack.c.bf16 %v523, %v519
    %v750 = vunpack.c.l.b16 %v686
    %v751 = vunpack.c.l.b16 %v687
    %v752 = vunpack.c.h.b16 %v686
    %v753 = vunpack.c.h.b16 %v687
    %v754 = vunpack.c.l.b16 %v688
    %v755 = vunpack.c.l.b16 %v689
    %v756 = vunpack.c.h.b16 %v688
    %v757 = vunpack.c.h.b16 %v689
    %v758 = vunpack.c.l.b16 %v690
    %v759 = vunpack.c.l.b16 %v691
    %v760 = vunpack.c.h.b16 %v690
    %v761 = vunpack.c.h.b16 %v691
    %v762 = vunpack.c.l.b16 %v692
    %v763 = vunpack.c.l.b16 %v693
    %v764 = vunpack.c.h.b16 %v692
    %v765 = vunpack.c.h.b16 %v693
    %v766 = vunpack.c.l.b16 %v694
    %v767 = vunpack.c.l.b16 %v695
    %v768 = vunpack.c.h.b16 %v694
    %v769 = vunpack.c.h.b16 %v695
    %v770 = vunpack.c.l.b16 %v696
    %v771 = vunpack.c.l.b16 %v697
    %v772 = vunpack.c.h.b16 %v696
    %v773 = vunpack.c.h.b16 %v697
    %v774 = vunpack.c.l.b16 %v698
    %v775 = vunpack.c.l.b16 %v699
    %v776 = vunpack.c.h.b16 %v698
    %v777 = vunpack.c.h.b16 %v699
    %v778 = vunpack.c.l.b16 %v700
    %v779 = vunpack.c.l.b16 %v701
    %v780 = vunpack.c.h.b16 %v700
    %v781 = vunpack.c.h.b16 %v701
    %v782 = vunpack.c.l.b16 %v702
    %v783 = vunpack.c.l.b16 %v703
    %v784 = vunpack.c.h.b16 %v702
    %v785 = vunpack.c.h.b16 %v703
    %v786 = vunpack.c.l.b16 %v704
    %v787 = vunpack.c.l.b16 %v705
    %v788 = vunpack.c.h.b16 %v704
    %v789 = vunpack.c.h.b16 %v705
    %v790 = vunpack.c.l.b16 %v706
    %v791 = vunpack.c.l.b16 %v707
    %v792 = vunpack.c.h.b16 %v706
    %v793 = vunpack.c.h.b16 %v707
    %v794 = vunpack.c.l.b16 %v708
    %v795 = vunpack.c.l.b16 %v709
    %v796 = vunpack.c.h.b16 %v708
    %v797 = vunpack.c.h.b16 %v709
    %v798 = vunpack.c.l.b16 %v710
    %v799 = vunpack.c.l.b16 %v711
    %v800 = vunpack.c.h.b16 %v710
    %v801 = vunpack.c.h.b16 %v711
    %v802 = vunpack.c.l.b16 %v712
    %v803 = vunpack.c.l.b16 %v713
    %v804 = vunpack.c.h.b16 %v712
    %v805 = vunpack.c.h.b16 %v713
    %v806 = vunpack.c.l.b16 %v714
    %v807 = vunpack.c.l.b16 %v715
    %v808 = vunpack.c.h.b16 %v714
    %v809 = vunpack.c.h.b16 %v715
    %v810 = vunpack.c.l.b16 %v716
    %v811 = vunpack.c.l.b16 %v717
    %v812 = vunpack.c.h.b16 %v716
    %v813 = vunpack.c.h.b16 %v717
    %v814 = vpack.c.b16 %v751, %v750
    %v815 = vpack.c.b16 %v753, %v752
    %v816 = vpack.c.b16 %v755, %v754
    %v817 = vpack.c.b16 %v757, %v756
    %v818 = vpack.c.b16 %v759, %v758
    %v819 = vpack.c.b16 %v761, %v760
    %v820 = vpack.c.b16 %v763, %v762
    %v821 = vpack.c.b16 %v765, %v764
    %v822 = vpack.c.b16 %v767, %v766
    %v823 = vpack.c.b16 %v769, %v768
    %v824 = vpack.c.b16 %v771, %v770
    %v825 = vpack.c.b16 %v773, %v772
    %v826 = vpack.c.b16 %v775, %v774
    %v827 = vpack.c.b16 %v777, %v776
    %v828 = vpack.c.b16 %v779, %v778
    %v829 = vpack.c.b16 %v781, %v780
    %v830 = vpack.c.b16 %v783, %v782
    %v831 = vpack.c.b16 %v785, %v784
    %v832 = vpack.c.b16 %v787, %v786
    %v833 = vpack.c.b16 %v789, %v788
    %v834 = vpack.c.b16 %v791, %v790
    %v835 = vpack.c.b16 %v793, %v792
    %v836 = vpack.c.b16 %v795, %v794
    %v837 = vpack.c.b16 %v797, %v796
    %v838 = vpack.c.b16 %v799, %v798
    %v839 = vpack.c.b16 %v801, %v800
    %v840 = vpack.c.b16 %v803, %v802
    %v841 = vpack.c.b16 %v805, %v804
    %v842 = vpack.c.b16 %v807, %v806
    %v843 = vpack.c.b16 %v809, %v808
    %v844 = vpack.c.b16 %v811, %v810
    %v845 = vpack.c.b16 %v813, %v812
    %878 = vst [vmem:[#allocation7] sm:$0xff] %v814
    %879 = vst [vmem:[#allocation7 + $0x8] sm:$0xff] %v815
    %880 = vst [vmem:[#allocation7 + $0x10] sm:$0xff] %v816
    %881 = vst [vmem:[#allocation7 + $0x18] sm:$0xff] %v817
    %882 = vst [vmem:[#allocation7 + $0x20] sm:$0xff] %v818
    %883 = vst [vmem:[#allocation7 + $0x28] sm:$0xff] %v819
    %884 = vst [vmem:[#allocation7 + $0x30] sm:$0xff] %v820
    %885 = vst [vmem:[#allocation7 + $0x38] sm:$0xff] %v821
    %886 = vst [vmem:[#allocation7 + $0x40] sm:$0xff] %v822
    %887 = vst [vmem:[#allocation7 + $0x48] sm:$0xff] %v823
    %888 = vst [vmem:[#allocation7 + $0x50] sm:$0xff] %v824
    %889 = vst [vmem:[#allocation7 + $0x58] sm:$0xff] %v825
    %890 = vst [vmem:[#allocation7 + $0x60] sm:$0xff] %v826
    %891 = vst [vmem:[#allocation7 + $0x68] sm:$0xff] %v827
    %892 = vst [vmem:[#allocation7 + $0x70] sm:$0xff] %v828
    %893 = vst [vmem:[#allocation7 + $0x78] sm:$0xff] %v829
    %894 = vst [vmem:[#allocation7 + $0x80] sm:$0xff] %v830
    %895 = vst [vmem:[#allocation7 + $0x88] sm:$0xff] %v831
    %896 = vst [vmem:[#allocation7 + $0x90] sm:$0xff] %v832
    %897 = vst [vmem:[#allocation7 + $0x98] sm:$0xff] %v833
    %898 = vst [vmem:[#allocation7 + $0xa0] sm:$0xff] %v834
    %899 = vst [vmem:[#allocation7 + $0xa8] sm:$0xff] %v835
    %900 = vst [vmem:[#allocation7 + $0xb0] sm:$0xff] %v836
    %901 = vst [vmem:[#allocation7 + $0xb8] sm:$0xff] %v837
    %902 = vst [vmem:[#allocation7 + $0xc0] sm:$0xff] %v838
    %903 = vst [vmem:[#allocation7 + $0xc8] sm:$0xff] %v839
    %904 = vst [vmem:[#allocation7 + $0xd0] sm:$0xff] %v840
    %905 = vst [vmem:[#allocation7 + $0xd8] sm:$0xff] %v841
    %906 = vst [vmem:[#allocation7 + $0xe0] sm:$0xff] %v842
    %907 = vst [vmem:[#allocation7 + $0xe8] sm:$0xff] %v843
    %908 = vst [vmem:[#allocation7 + $0xf0] sm:$0xff] %v844
    %909 = vst [vmem:[#allocation7 + $0xf8] sm:$0xff] %v845
    %910 = vst [vmem:[#allocation8] sm:$0xff] %v560
    %911 = vst [vmem:[#allocation8 + $0x8] sm:$0xff] %v563
    %912 = vst [vmem:[#allocation8 + $0x10] sm:$0xff] %v568
    %913 = vst [vmem:[#allocation8 + $0x18] sm:$0xff] %v571
    %914 = vst [vmem:[#allocation8 + $0x20] sm:$0xff] %v576
    %915 = vst [vmem:[#allocation8 + $0x28] sm:$0xff] %v579
    %916 = vst [vmem:[#allocation8 + $0x30] sm:$0xff] %v584
    %917 = vst [vmem:[#allocation8 + $0x38] sm:$0xff] %v587
    %918 = vst [vmem:[#allocation8 + $0x40] sm:$0xff] %v592
    %919 = vst [vmem:[#allocation8 + $0x48] sm:$0xff] %v595
    %920 = vst [vmem:[#allocation8 + $0x50] sm:$0xff] %v600
    %921 = vst [vmem:[#allocation8 + $0x58] sm:$0xff] %v603
    %922 = vst [vmem:[#allocation8 + $0x60] sm:$0xff] %v608
    %923 = vst [vmem:[#allocation8 + $0x68] sm:$0xff] %v611
    %924 = vst [vmem:[#allocation8 + $0x70] sm:$0xff] %v616
    %925 = vst [vmem:[#allocation8 + $0x78] sm:$0xff] %v619
    %926 = vst [vmem:[#allocation8 + $0x80] sm:$0xff] %v624
    %927 = vst [vmem:[#allocation8 + $0x88] sm:$0xff] %v627
    %928 = vst [vmem:[#allocation8 + $0x90] sm:$0xff] %v632
    %929 = vst [vmem:[#allocation8 + $0x98] sm:$0xff] %v635
    %930 = vst [vmem:[#allocation8 + $0xa0] sm:$0xff] %v640
    %931 = vst [vmem:[#allocation8 + $0xa8] sm:$0xff] %v643
    %932 = vst [vmem:[#allocation8 + $0xb0] sm:$0xff] %v648
    %933 = vst [vmem:[#allocation8 + $0xb8] sm:$0xff] %v651
    %934 = vst [vmem:[#allocation8 + $0xc0] sm:$0xff] %v656
    %935 = vst [vmem:[#allocation8 + $0xc8] sm:$0xff] %v659
    %936 = vst [vmem:[#allocation8 + $0xd0] sm:$0xff] %v664
    %937 = vst [vmem:[#allocation8 + $0xd8] sm:$0xff] %v667
    %938 = vst [vmem:[#allocation8 + $0xe0] sm:$0xff] %v672
    %939 = vst [vmem:[#allocation8 + $0xe8] sm:$0xff] %v675
    %940 = vst [vmem:[#allocation8 + $0xf0] sm:$0xff] %v680
    %941 = vst [vmem:[#allocation8 + $0xf8] sm:$0xff] %v683
    // Predicated region
    $region18: #{tpu_custom_call.1} parent=1 // pred_check
      _
    $region19: #{tpu_custom_call.1} parent=1 // pred_check_branch
      %943 = sbr.rel (0) target = $region21
    $region20: #{tpu_custom_call.1} parent=1 // pred_region
      %s945 = ssub.s32 4096, 4096
      %946 = vsyncadd [#allocation4], %s945
      %s947 = sshll.u32 [#allocation7], 4
      %s948 = int_to_ptr.vmem [resolvable:$true] %s947
      %953 = dma.vmem_to_hbm [thread:$0]  %s948, 4096, %s2, [#allocation4], 128, 128, 8
    $region21: #{tpu_custom_call.1} parent=1 // pred_fallthru
      _
    // Predicated region
    $region22: #{tpu_custom_call.1} parent=1 // pred_check
      _
    $region23: #{tpu_custom_call.1} parent=1 // pred_check_branch
      %955 = sbr.rel (0) target = $region25
    $region24: #{tpu_custom_call.1} parent=1 // pred_region
      %s957 = ssub.s32 4096, 4096
      %958 = vsyncadd [#allocation9], %s957
      %s959 = sshll.u32 [#allocation8], 4
      %s960 = int_to_ptr.vmem [resolvable:$true] %s959
      %965 = dma.vmem_to_hbm [thread:$0]  %s960, 4096, %s3, [#allocation9], 128, 128, 8
    $region25: #{tpu_custom_call.1} parent=1 // pred_fallthru
      _
    // Predicated region
    $region26: #{tpu_custom_call.1} parent=1 // pred_check
      _
    $region27: #{tpu_custom_call.1} parent=1 // pred_check_branch
      %967 = sbr.rel (0) target = $region29
    $region28: #{tpu_custom_call.1} parent=1 // pred_region
      %968 = dma.done [#allocation4], 4096
    $region29: #{tpu_custom_call.1} parent=1 // pred_fallthru
      _
    // Predicated region
    $region30: #{tpu_custom_call.1} parent=1 // pred_check
      _
    $region31: #{tpu_custom_call.1} parent=1 // pred_check_branch
      %970 = sbr.rel (0) target = $region33
    $region32: #{tpu_custom_call.1} parent=1 // pred_region
      %971 = dma.done [#allocation9], 4096
    $region33: #{tpu_custom_call.1} parent=1 // pred_fallthru
      _
    %972 = vsyncpa [#allocation3], 1
    %973 = vsyncpa [#allocation6], 1
    %974 = vsyncpa [#allocation4], 1
    %975 = vsyncpa [#allocation9], 1

</llo_original>
